<compile_context>
chip_gen: v6e
topology: v6e:2x2x1
jax: 0.10.0
libtpu: 0.0.40
codegen_flags: <defaults>
</compile_context>

<pallas_src>
import numpy as np
import jax
import jax.numpy as jnp
from jax.experimental import pallas as pl
from jax.experimental.pallas import tpu as pltpu

_LANES = 128
_SUBLANES = 8
_MAX_ROWS_PER_BLOCK = 4096   # (1, 4096, 128) f32 block = 2 MiB / input / buffer
_SPLIT_MIN_ROWS = 256        # only split the r axis (v7x megacore) when there
                             # is enough work per core to amortize it


def _sublane_granularity(dtype):
    """Second-minor tile granularity for a dtype (8 / 16 / 32 sublanes)."""
    itemsize = np.dtype(dtype).itemsize
    if itemsize >= 4:
        return 8
    if itemsize == 2:
        return 16
    return 32


def _round_up(x, m):
    return ((x + m - 1) // m) * m


def _metrics_kernel(x_ref, t_ref, out_ref, acc_tp_ref, acc_tn_ref, acc_t_ref):
    """Accumulate per-(batch, split) partial sums.

    x_ref / t_ref : (1, tr, 128) blocks (native dtypes).
    out_ref       : (1, 8, 128) f32, resident across the r axis; row 0,
                    lanes 0..2 receive (TP, TN incl. zero-pad, targets.sum()).
    acc_*         : (8, 128) f32 VMEM scratch accumulators.
    """
    r = pl.program_id(1)
    tr = x_ref.shape[1]

    @pl.when(r == 0)
    def _init():
        acc_tp_ref[...] = jnp.zeros_like(acc_tp_ref)
        acc_tn_ref[...] = jnp.zeros_like(acc_tn_ref)
        acc_t_ref[...] = jnp.zeros_like(acc_t_ref)

    x = x_ref[0]                                  # (tr, 128), native dtype
    tf = t_ref[0].astype(jnp.float32)             # (tr, 128), f32

    # Trimmed compare pipeline, no per-element index/validity masks.
    half = jnp.asarray(0.5, dtype=x.dtype)
    xb = x >= half                                # pred == 1
    t1 = tf == jnp.float32(1.0)
    t0 = tf == jnp.float32(0.0)

    one = jnp.float32(1.0)
    zero = jnp.float32(0.0)
    tpf = jnp.where(xb & t1, one, zero)           # matches with target == 1
    tnf = jnp.where((~xb) & t0, one, zero)        # matches with target == 0

    def fold(v):
        # (tr, 128) -> (8, 128): pure elementwise vreg adds (VPU), no XLU.
        return jnp.sum(v.reshape(tr // _SUBLANES, _SUBLANES, _LANES), axis=0)

    acc_tp_ref[...] += fold(tpf)                  # partial TP count
    acc_tn_ref[...] += fold(tnf)                  # partial TN count (+ pads)
    acc_t_ref[...] += fold(tf)                    # partial targets.sum()

    @pl.when(r == pl.num_programs(1) - 1)
    def _epilogue():
        tp = jnp.sum(acc_tp_ref[...])
        tn = jnp.sum(acc_tn_ref[...])             # includes zero-pad matches
        st = jnp.sum(acc_t_ref[...])
        lane = jax.lax.broadcasted_iota(jnp.int32, (_SUBLANES, _LANES), 1)
        out_ref[0] = (jnp.where(lane == 0, tp, zero)
                      + jnp.where(lane == 1, tn, zero)
                      + jnp.where(lane == 2, st, zero))


def loss_all_batch_each(inputs_, targets):
    """Returns (precisions, recalls, FPRs, FNRs), each of shape (B,) float32."""
    inputs_ = jnp.asarray(inputs_)
    targets = jnp.asarray(targets)
    if not jnp.issubdtype(inputs_.dtype, jnp.floating):
        inputs_ = inputs_.astype(jnp.float32)
    # Targets stream at their native (possibly narrower) dtype; kernel upcasts.

    B = inputs_.shape[0]
    n = int(np.prod(inputs_.shape[1:])) if inputs_.ndim > 1 else 1
    rows_raw = pl.cdiv(n, _LANES)

    # v7x megacore: when the batch axis alone can't feed both TensorCores,
    # split the reduction axis in two; partials are combined in the wrapper.
    split = 2 if (B == 1 and rows_raw >= _SPLIT_MIN_ROWS) else 1

    gran = max(_SUBLANES,
               _sublane_granularity(inputs_.dtype),
               _sublane_granularity(targets.dtype))

    # Choose TR so it divides rows exactly: no ragged last block, no OOB
    # block reads, no in-kernel masking at all.
    num_r_total = max(split, pl.cdiv(rows_raw, _MAX_ROWS_PER_BLOCK))
    num_r_total = _round_up(num_r_total, split)
    tr = _round_up(pl.cdiv(rows_raw, num_r_total), gran)   # <= 4096
    rows = num_r_total * tr
    num_r_inner = num_r_total // split

    padded_n = rows * _LANES
    pad = padded_n - n          # zero-pad elements only inflate the TN count

    x = inputs_.reshape(B, n)
    t = targets.reshape(B, n)
    if pad:
        # TODO(synk): ragged C*H*W pays one extra XLA pad pass over HBM.
        x = jnp.pad(x, ((0, 0), (0, pad)))
        t = jnp.pad(t, ((0, 0), (0, pad)))
    x = x.reshape(B, rows, _LANES)
    t = t.reshape(B, rows, _LANES)

    if split == 1:
        in_map = lambda p, r: (p, r, 0)
    else:
        in_map = lambda p, r: (p // split, (p % split) * num_r_inner + r, 0)

    bytes_accessed = (x.size * x.dtype.itemsize + t.size * t.dtype.itemsize
                      + B * split * _SUBLANES * _LANES * 4)
    cost = pl.CostEstimate(flops=10 * B * rows * _LANES,
                           transcendentals=0,
                           bytes_accessed=bytes_accessed)

    out = pl.pallas_call(
        _metrics_kernel,
        out_shape=jax.ShapeDtypeStruct((B * split, _SUBLANES, _LANES),
                                       jnp.float32),
        grid_spec=pltpu.PrefetchScalarGridSpec(
            num_scalar_prefetch=0,
            grid=(B * split, num_r_inner),
            in_specs=[pl.BlockSpec((1, tr, _LANES), in_map),
                      pl.BlockSpec((1, tr, _LANES), in_map)],
            out_specs=pl.BlockSpec((1, _SUBLANES, _LANES),
                                   lambda p, r: (p, 0, 0)),
            scratch_shapes=[pltpu.VMEM((_SUBLANES, _LANES), jnp.float32)] * 3,
        ),
        compiler_params=pltpu.CompilerParams(
            dimension_semantics=("parallel", "arbitrary"),
            # 4096-row f32 blocks + elementwise temporaries overflow v5e's
            # 16 MiB default scoped VMEM; 48 MiB is safe on v5e/v6e/v7x.
            vmem_limit_bytes=48 * 1024 * 1024),
        cost_estimate=cost,
    )(x, t)

    # Combine split partials and finalize (tiny (B, 3) computation).
    parts = out.reshape(B, split, _SUBLANES, _LANES)[:, :, 0, :3].sum(axis=1)
    tp = parts[:, 0]                              # T_.sum()
    tn = parts[:, 1] - jnp.float32(pad)           # len(T_) - T_.sum()
    sum_t = parts[:, 2]                           # targets.sum()

    n_f = jnp.float32(n)
    fp = sum_t - tp                               # F_.sum()        (module "FP")
    fn = (n_f - (tp + tn)) - fp                   # len(F_)-F_.sum() (module "FN")

    def safe_div(num, den):
        ok = den != 0.0
        return jnp.where(ok, num / jnp.where(ok, den, 1.0), 0.0)

    precisions = safe_div(tp, tp + fp)
    recalls = safe_div(tp, tp + fn)
    fprs = safe_div(fp, fp + tn)
    fnrs = safe_div(fn, fn + tp)
    return precisions, recalls, fprs, fnrs


def _reference_numpy(inputs_, targets):
    inputs_ = np.asarray(inputs_, np.float32)
    targets = np.asarray(targets, np.float32)
    B = inputs_.shape[0]
    precs, recs, fprs, fnrs = [], [], [], []

    def safe_div(num, denom):
        return num / denom if denom else 0.0

    for i in range(B):
        inp = inputs_[i].reshape(-1).copy()
        tgt = targets[i].reshape(-1)
        inp = np.where(inp >= 0.5, 1.0, 0.0).astype(np.float32)
        T_ = tgt[inp == tgt]
        F_ = tgt[inp != tgt]
        TP = float(T_.sum())
        TN = float(len(T_) - T_.sum())
        FP = float(F_.sum())
        FN = float(len(F_) - F_.sum())
        precs.append(safe_div(TP, TP + FP))
        recs.append(safe_div(TP, TP + FN))
        fprs.append(safe_div(FP, FP + TN))
        fnrs.append(safe_div(FN, FN + TP))
    return (np.array(precs, np.float32), np.array(recs, np.float32),
            np.array(fprs, np.float32), np.array(fnrs, np.float32))


if __name__ == "__main__":
    key = jax.random.PRNGKey(0)
    k1, k2, k3, k4 = jax.random.split(key, 4)

    # Case 1: small aligned shapes (the module's typical use).
    B, C, H, W = 2, 4, 16, 16
    inputs_ = jax.random.uniform(k1, (B, C, H, W), dtype=jnp.float32)
    targets = (jax.random.uniform(k2, (B, C, H, W)) > 0.5).astype(jnp.float32)
    outs = jax.block_until_ready(loss_all_batch_each(inputs_, targets))
    refs = _reference_numpy(np.asarray(inputs_), np.asarray(targets))
    for got, want in zip(outs, refs):
        np.testing.assert_allclose(np.asarray(got), want, rtol=1e-6, atol=1e-6)

    # Case 2: B == 1 (exercises the megacore r-axis split) with ragged C*H*W
    # (exercises the static zero-pad correction).
    inputs2 = jax.random.uniform(k3, (1, 3, 105, 105), dtype=jnp.float32)
    targets2 = (jax.random.uniform(k4, (1, 3, 105, 105)) > 0.5).astype(jnp.float32)
    outs2 = jax.block_until_ready(loss_all_batch_each(inputs2, targets2))
    refs2 = _reference_numpy(np.asarray(inputs2), np.asarray(targets2))
    for got, want in zip(outs2, refs2):
        np.testing.assert_allclose(np.asarray(got), want, rtol=1e-5, atol=1e-6)

    print("KERNEL_OK")
</pallas_src>

<mosaic_0001>
module attributes {stable_mosaic.version = 11 : i64} {
  func.func @_metrics_kernel(%arg0: i32, %arg1: i32, %arg2: memref<1x8x128xf32, #tpu.memory_space<vmem>>, %arg3: memref<1x8x128xf32, #tpu.memory_space<vmem>>, %arg4: memref<1x8x128xf32, #tpu.memory_space<vmem>>, %arg5: memref<8x128xf32, #tpu.memory_space<vmem>>, %arg6: memref<8x128xf32, #tpu.memory_space<vmem>>, %arg7: memref<8x128xf32, #tpu.memory_space<vmem>>) attributes {dimension_semantics = [#tpu.dimension_semantics<parallel>, #tpu.dimension_semantics<arbitrary>], iteration_bounds = array<i64: 2, 1>, scalar_prefetch = 0 : i64, scratch_operands = 3 : i64, tpu.core_type = #tpu.core_type<tc>, window_params = [{transform_indices = @transform_0, window_bounds = array<i64: 1, 8, 128>}, {transform_indices = @transform_1, window_bounds = array<i64: 1, 8, 128>}, {transform_indices = @transform_2, window_bounds = array<i64: 1, 8, 128>}]} {
    %c0_i32 = arith.constant 0 : i32
    %0 = arith.cmpi eq, %arg1, %c0_i32 : i32
    %1 = arith.extui %0 : i1 to i32
    %c0_i32_0 = arith.constant 0 : i32
    %2 = arith.cmpi ne, %1, %c0_i32_0 : i32
    scf.if %2 {
      %cst_31 = arith.constant 0.000000e+00 : f32
      %40 = vector.broadcast %cst_31 : f32 to vector<8x128xf32>
      %c0_32 = arith.constant 0 : index
      %c0_33 = arith.constant 0 : index
      %41 = vector.load %arg5[%c0_32, %c0_33] : memref<8x128xf32, #tpu.memory_space<vmem>>, vector<8x128xf32>
      tpu.vector_store %arg5[%c0_32, %c0_33], %40 {strides = array<i32>} : memref<8x128xf32, #tpu.memory_space<vmem>>, vector<8x128xf32>,
      %cst_34 = arith.constant 0.000000e+00 : f32
      %42 = vector.broadcast %cst_34 : f32 to vector<8x128xf32>
      %c0_35 = arith.constant 0 : index
      %c0_36 = arith.constant 0 : index
      %43 = vector.load %arg6[%c0_35, %c0_36] : memref<8x128xf32, #tpu.memory_space<vmem>>, vector<8x128xf32>
      tpu.vector_store %arg6[%c0_35, %c0_36], %42 {strides = array<i32>} : memref<8x128xf32, #tpu.memory_space<vmem>>, vector<8x128xf32>,
      %cst_37 = arith.constant 0.000000e+00 : f32
      %44 = vector.broadcast %cst_37 : f32 to vector<8x128xf32>
      %c0_38 = arith.constant 0 : index
      %c0_39 = arith.constant 0 : index
      %45 = vector.load %arg7[%c0_38, %c0_39] : memref<8x128xf32, #tpu.memory_space<vmem>>, vector<8x128xf32>
      tpu.vector_store %arg7[%c0_38, %c0_39], %44 {strides = array<i32>} : memref<8x128xf32, #tpu.memory_space<vmem>>, vector<8x128xf32>,
    } else {
    }
    %c0 = arith.constant 0 : index
    %c0_1 = arith.constant 0 : index
    %c0_2 = arith.constant 0 : index
    %3 = vector.load %arg2[%c0, %c0_1, %c0_2] : memref<1x8x128xf32, #tpu.memory_space<vmem>>, vector<1x8x128xf32>
    %4 = vector.shape_cast %3 : vector<1x8x128xf32> to vector<8x128xf32>
    %c0_3 = arith.constant 0 : index
    %c0_4 = arith.constant 0 : index
    %c0_5 = arith.constant 0 : index
    %5 = vector.load %arg3[%c0_3, %c0_4, %c0_5] : memref<1x8x128xf32, #tpu.memory_space<vmem>>, vector<1x8x128xf32>
    %6 = vector.shape_cast %5 : vector<1x8x128xf32> to vector<8x128xf32>
    %cst = arith.constant 5.000000e-01 : f32
    %7 = vector.broadcast %cst : f32 to vector<8x128xf32>
    %8 = arith.cmpf oge, %4, %7 : vector<8x128xf32>
    %cst_6 = arith.constant 1.000000e+00 : f32
    %9 = vector.broadcast %cst_6 : f32 to vector<8x128xf32>
    %10 = arith.cmpf oeq, %6, %9 : vector<8x128xf32>
    %cst_7 = arith.constant 0.000000e+00 : f32
    %11 = vector.broadcast %cst_7 : f32 to vector<8x128xf32>
    %12 = arith.cmpf oeq, %6, %11 : vector<8x128xf32>
    %13 = arith.andi %8, %10 : vector<8x128xi1>
    %cst_8 = arith.constant 1.000000e+00 : f32
    %cst_9 = arith.constant 0.000000e+00 : f32
    %14 = vector.broadcast %cst_8 : f32 to vector<8x128xf32>
    %15 = vector.broadcast %cst_9 : f32 to vector<8x128xf32>
    %16 = arith.select %13, %14, %15 : vector<8x128xi1>, vector<8x128xf32>
    %cst_10 = arith.constant dense<true> : vector<8x128xi1>
    %17 = arith.xori %8, %cst_10 : vector<8x128xi1>
    %18 = arith.andi %17, %12 : vector<8x128xi1>
    %cst_11 = arith.constant 1.000000e+00 : f32
    %cst_12 = arith.constant 0.000000e+00 : f32
    %19 = vector.broadcast %cst_11 : f32 to vector<8x128xf32>
    %20 = vector.broadcast %cst_12 : f32 to vector<8x128xf32>
    %21 = arith.select %18, %19, %20 : vector<8x128xi1>, vector<8x128xf32>
    %c0_13 = arith.constant 0 : index
    %c0_14 = arith.constant 0 : index
    %22 = vector.load %arg5[%c0_13, %c0_14] : memref<8x128xf32, #tpu.memory_space<vmem>>, vector<8x128xf32>
    %23 = vector.shape_cast %16 : vector<8x128xf32> to vector<1x8x128xf32>
    %cst_15 = arith.constant dense<0.000000e+00> : vector<8x128xf32>
    %24 = vector.multi_reduction <add>, %23, %cst_15 [0] : vector<1x8x128xf32> to vector<8x128xf32>
    %25 = arith.addf %22, %24 : vector<8x128xf32>
    %c0_16 = arith.constant 0 : index
    %c0_17 = arith.constant 0 : index
    %26 = vector.load %arg5[%c0_16, %c0_17] : memref<8x128xf32, #tpu.memory_space<vmem>>, vector<8x128xf32>
    tpu.vector_store %arg5[%c0_16, %c0_17], %25 {strides = array<i32>} : memref<8x128xf32, #tpu.memory_space<vmem>>, vector<8x128xf32>,
    %c0_18 = arith.constant 0 : index
    %c0_19 = arith.constant 0 : index
    %27 = vector.load %arg6[%c0_18, %c0_19] : memref<8x128xf32, #tpu.memory_space<vmem>>, vector<8x128xf32>
    %28 = vector.shape_cast %21 : vector<8x128xf32> to vector<1x8x128xf32>
    %cst_20 = arith.constant dense<0.000000e+00> : vector<8x128xf32>
    %29 = vector.multi_reduction <add>, %28, %cst_20 [0] : vector<1x8x128xf32> to vector<8x128xf32>
    %30 = arith.addf %27, %29 : vector<8x128xf32>
    %c0_21 = arith.constant 0 : index
    %c0_22 = arith.constant 0 : index
    %31 = vector.load %arg6[%c0_21, %c0_22] : memref<8x128xf32, #tpu.memory_space<vmem>>, vector<8x128xf32>
    tpu.vector_store %arg6[%c0_21, %c0_22], %30 {strides = array<i32>} : memref<8x128xf32, #tpu.memory_space<vmem>>, vector<8x128xf32>,
    %c0_23 = arith.constant 0 : index
    %c0_24 = arith.constant 0 : index
    %32 = vector.load %arg7[%c0_23, %c0_24] : memref<8x128xf32, #tpu.memory_space<vmem>>, vector<8x128xf32>
    %33 = vector.shape_cast %6 : vector<8x128xf32> to vector<1x8x128xf32>
    %cst_25 = arith.constant dense<0.000000e+00> : vector<8x128xf32>
    %34 = vector.multi_reduction <add>, %33, %cst_25 [0] : vector<1x8x128xf32> to vector<8x128xf32>
    %35 = arith.addf %32, %34 : vector<8x128xf32>
    %c0_26 = arith.constant 0 : index
    %c0_27 = arith.constant 0 : index
    %36 = vector.load %arg7[%c0_26, %c0_27] : memref<8x128xf32, #tpu.memory_space<vmem>>, vector<8x128xf32>
    tpu.vector_store %arg7[%c0_26, %c0_27], %35 {strides = array<i32>} : memref<8x128xf32, #tpu.memory_space<vmem>>, vector<8x128xf32>,
    %c0_i32_28 = arith.constant 0 : i32
    %37 = arith.cmpi eq, %arg1, %c0_i32_28 : i32
    %38 = arith.extui %37 : i1 to i32
    %cst_29 = arith.constant 0.000000e+00 : f32
    %c0_i32_30 = arith.constant 0 : i32
    %39 = arith.cmpi ne, %38, %c0_i32_30 : i32
    scf.if %39 {
      %c0_31 = arith.constant 0 : index
      %c0_32 = arith.constant 0 : index
      %40 = vector.load %arg5[%c0_31, %c0_32] : memref<8x128xf32, #tpu.memory_space<vmem>>, vector<8x128xf32>
      %41 = vector.shape_cast %40 : vector<8x128xf32> to vector<1x8x128xf32>
      %cst_33 = arith.constant dense<0.000000e+00> : vector<1xf32>
      %42 = vector.multi_reduction <add>, %41, %cst_33 [1, 2] : vector<1x8x128xf32> to vector<1xf32>
      %43 = vector.shape_cast %42 : vector<1xf32> to vector<1x1x1xf32>
      %44 = vector.extract %43[0, 0, 0] : f32 from vector<1x1x1xf32>
      %c0_34 = arith.constant 0 : index
      %c0_35 = arith.constant 0 : index
      %45 = vector.load %arg6[%c0_34, %c0_35] : memref<8x128xf32, #tpu.memory_space<vmem>>, vector<8x128xf32>
      %46 = vector.shape_cast %45 : vector<8x128xf32> to vector<1x8x128xf32>
      %cst_36 = arith.constant dense<0.000000e+00> : vector<1xf32>
      %47 = vector.multi_reduction <add>, %46, %cst_36 [1, 2] : vector<1x8x128xf32> to vector<1xf32>
      %48 = vector.shape_cast %47 : vector<1xf32> to vector<1x1x1xf32>
      %49 = vector.extract %48[0, 0, 0] : f32 from vector<1x1x1xf32>
      %c0_37 = arith.constant 0 : index
      %c0_38 = arith.constant 0 : index
      %50 = vector.load %arg7[%c0_37, %c0_38] : memref<8x128xf32, #tpu.memory_space<vmem>>, vector<8x128xf32>
      %51 = vector.shape_cast %50 : vector<8x128xf32> to vector<1x8x128xf32>
      %cst_39 = arith.constant dense<0.000000e+00> : vector<1xf32>
      %52 = vector.multi_reduction <add>, %51, %cst_39 [1, 2] : vector<1x8x128xf32> to vector<1xf32>
      %53 = vector.shape_cast %52 : vector<1xf32> to vector<1x1x1xf32>
      %54 = vector.extract %53[0, 0, 0] : f32 from vector<1x1x1xf32>
      %55 = tpu.iota {dimensions = array<i32: 1>} : vector<8x128xi32>
      %c0_i32_40 = arith.constant 0 : i32
      %56 = vector.broadcast %c0_i32_40 : i32 to vector<8x128xi32>
      %57 = arith.cmpi eq, %55, %56 : vector<8x128xi32>
      %58 = vector.broadcast %44 : f32 to vector<8x128xf32>
      %59 = vector.broadcast %cst_29 : f32 to vector<8x128xf32>
      %60 = arith.select %57, %58, %59 : vector<8x128xi1>, vector<8x128xf32>
      %c1_i32 = arith.constant 1 : i32
      %61 = vector.broadcast %c1_i32 : i32 to vector<8x128xi32>
      %62 = arith.cmpi eq, %55, %61 : vector<8x128xi32>
      %63 = vector.broadcast %49 : f32 to vector<8x128xf32>
      %64 = vector.broadcast %cst_29 : f32 to vector<8x128xf32>
      %65 = arith.select %62, %63, %64 : vector<8x128xi1>, vector<8x128xf32>
      %66 = arith.addf %60, %65 : vector<8x128xf32>
      %c2_i32 = arith.constant 2 : i32
      %67 = vector.broadcast %c2_i32 : i32 to vector<8x128xi32>
      %68 = arith.cmpi eq, %55, %67 : vector<8x128xi32>
      %69 = vector.broadcast %54 : f32 to vector<8x128xf32>
      %70 = vector.broadcast %cst_29 : f32 to vector<8x128xf32>
      %71 = arith.select %68, %69, %70 : vector<8x128xi1>, vector<8x128xf32>
      %72 = arith.addf %66, %71 : vector<8x128xf32>
      %c0_41 = arith.constant 0 : index
      %c0_42 = arith.constant 0 : index
      %c0_43 = arith.constant 0 : index
      %73 = vector.load %arg4[%c0_41, %c0_42, %c0_43] : memref<1x8x128xf32, #tpu.memory_space<vmem>>, vector<1x8x128xf32>
      %74 = vector.shape_cast %73 : vector<1x8x128xf32> to vector<8x128xf32>
      %75 = vector.shape_cast %72 : vector<8x128xf32> to vector<1x8x128xf32>
      tpu.vector_store %arg4[%c0_41, %c0_42, %c0_43], %75 {strides = array<i32>} : memref<1x8x128xf32, #tpu.memory_space<vmem>>, vector<1x8x128xf32>,
    } else {
    }
    return
  }
  func.func @transform_0(%arg0: i32, %arg1: i32) -> (i32, i32, i32) {
    %c0_i32 = arith.constant 0 : i32
    %c0_i32_0 = arith.constant 0 : i32
    return %arg0, %arg1, %c0_i32 : i32, i32, i32
  }
  func.func @transform_1(%arg0: i32, %arg1: i32) -> (i32, i32, i32) {
    %c0_i32 = arith.constant 0 : i32
    %c0_i32_0 = arith.constant 0 : i32
    return %arg0, %arg1, %c0_i32 : i32, i32, i32
  }
  func.func @transform_2(%arg0: i32, %arg1: i32) -> (i32, i32, i32) {
    %c0_i32 = arith.constant 0 : i32
    %c0_i32_0 = arith.constant 0 : i32
    %c0_i32_1 = arith.constant 0 : i32
    return %arg0, %c0_i32, %c0_i32_0 : i32, i32, i32
  }
}

</mosaic_0001>

<llo_original>
// kernel: tpu_custom_call.1
$region0: #{tpu_custom_call.1}
  #allocation0 [shape = 'u32[]', space=smem, size = 0x4, offset = 0x4, fixed_abs, tag = 'smem constant byte address 0x4 - core index']
  #allocation1 [shape = 'u32[144,128]{1,0:T(1,128)}', space=vmem, size = 0x12000, scoped, tag = 'internal scratch']
  #allocation2 [shape = 'f32[8,128]{1,0:T(8,128)}', space=vmem, size = 0x1000, scoped, tag = 'scratch operand']
  #allocation3 [shape = 'f32[8,128]{1,0:T(8,128)}', space=vmem, size = 0x1000, scoped, tag = 'scratch operand']
  #allocation4 [shape = 'f32[8,128]{1,0:T(8,128)}', space=vmem, size = 0x1000, scoped, tag = 'scratch operand']
  %s0 = inlined_call_operand.hbm [shape: f32[2,8,128], index: 0, kind: input, shape index: {}]
  %s1 = inlined_call_operand.hbm [shape: f32[2,8,128], index: 1, kind: input, shape index: {}]
  %s2 = inlined_call_operand.hbm [shape: f32[2,8,128], index: 2, kind: output, shape index: {}]
  %s3 = sld [smem:[#allocation0]]
  $region57: #{tpu_custom_call.1} parent=0
    _
  %s5 = ssub.s32 1, %s3
  %s6 = scalar_select 0, %s5, %s3
  $region1: #{tpu_custom_call.1} parent=0
    #allocation5 [shape = 'u8[8192]{0}', space=vmem, size = 0x2000, scoped, tag = 'input window, operand 0']
    #allocation6 [shape = 's32[2]{0}', space=sflag, size = 0x8, scoped, tag = 'scoped memory for tpu_custom_call.1']
    #allocation7 [shape = 's32[2]{0}', space=sflag, size = 0x8, scoped, tag = 'scoped memory for tpu_custom_call.1']
    #allocation8 [shape = 'u8[8192]{0}', space=vmem, size = 0x2000, scoped, tag = 'input window, operand 1']
    #allocation9 [shape = 's32[2]{0}', space=sflag, size = 0x8, scoped, tag = 'scoped memory for tpu_custom_call.1']
    #allocation10 [shape = 'u8[8192]{0}', space=vmem, size = 0x2000, scoped, tag = 'output window, operand 0']
    %7 = vsyncpa [#allocation6], 0
    %s8 = scalar_lea.sflag [#allocation6], 1
    %9 = vsyncpa %s8, 0
    %10 = vsyncpa [#allocation9], 0
    %s11 = scalar_lea.sflag [#allocation9], 1
    %12 = vsyncpa %s11, 0
    %13 = vsyncpa [#allocation7], 0
    %s14 = scalar_lea.sflag [#allocation7], 1
    %15 = vsyncpa %s14, 0
    loop: start=0, step=1, limit=4
    $region2: #{tpu_custom_call.1} parent=1 // loop_pre_header
      _
    $region3: #{tpu_custom_call.1} parent=1 // loop_header
      %s17 = sphi 0, %s21
      %p18 = scmp.ge.s32.totalorder %s17, 4
      %s24 = sphi 0, %s36
      %s25 = sphi 0, %s32
      %s26 = sphi 0, %s24
      %s27 = sphi 0, %s25
      %s28 = sphi 0, %s26
      %s29 = sphi 0, %s27
      %s41 = sphi 0, %s43
      %s44 = sphi 0, %s41
      %s45 = sphi 0, %s44
      %s61 = sphi 0, %s45
      %s69 = sphi 0, %s71
      %s72 = sphi 0, %s69
      %s73 = sphi 0, %s72
      %s89 = sphi 0, %s73
      %s95 = sphi 0, %s97
      %s98 = sphi 0, %s95
      %s99 = sphi 0, %s98
      %s115 = sphi 0, %s99
    $region4: #{tpu_custom_call.1} parent=1 // loop_header_branch
      %20 = sbr.rel (%p18) target = $region8
    $region5: #{tpu_custom_call.1} parent=1 // loop_body
      %s22 = ssub.s32 %s17, 1
      %s23 = ssub.s32 %s17, 2
      %s30 = sadd.s32 1, %s25
      %p31 = scmp.ge.s32.totalorder %s30, 1
      %s32 = scalar_select %p31, 0, %s30
      %s33 = sadd.s32 1, %s24
      %s34 = scalar_select %p31, %s33, %s24
      %p35 = scmp.ge.s32.totalorder %s34, 2
      %s36 = scalar_select %p35, 0, %s34
      %s37 = ssub.s32 %s24, %s36
      %s38 = ssub.s32 %s25, %s32
      %s39 = sor.u32 %s37, %s38
      %p40 = scmp.eq.s32.totalorder %s39, 0
      %s42 = sadd.s32 %s41, 1
      %s43 = scalar_select %p40, %s41, %s42
      %p46 = pneg %p40
      %p47 = scmp.eq.s32.totalorder %s17, 1
      %p48 = por %p46, %p47
      %p49 = scmp.ne.s32.totalorder %s41, %s44
      %p50 = scmp.eq.s32.totalorder %s17, 0
      %p51 = por %p49, %p50
      %p52 = scmp.ne.s32.totalorder %s41, %s44
      %p53 = scmp.eq.s32.totalorder %s22, 1
      %p54 = por %p52, %p53
      %p55 = scmp.ne.s32.totalorder %s44, %s45
      %p56 = scmp.eq.s32.totalorder %s22, 0
      %p57 = por %p55, %p56
      %p58 = scmp.ne.s32.totalorder %s44, %s45
      %p59 = scmp.eq.s32.totalorder %s23, 1
      %p60 = por %p58, %p59
      %p62 = scmp.ne.s32.totalorder %s45, %s61
      %p63 = scmp.eq.s32.totalorder %s23, 0
      %p64 = por %p62, %p63
      %s65 = ssub.s32 %s24, %s36
      %s66 = ssub.s32 %s25, %s32
      %s67 = sor.u32 %s65, %s66
      %p68 = scmp.eq.s32.totalorder %s67, 0
      %s70 = sadd.s32 %s69, 1
      %s71 = scalar_select %p68, %s69, %s70
      %p74 = pneg %p68
      %p75 = scmp.eq.s32.totalorder %s17, 1
      %p76 = por %p74, %p75
      %p77 = scmp.ne.s32.totalorder %s69, %s72
      %p78 = scmp.eq.s32.totalorder %s17, 0
      %p79 = por %p77, %p78
      %p80 = scmp.ne.s32.totalorder %s69, %s72
      %p81 = scmp.eq.s32.totalorder %s22, 1
      %p82 = por %p80, %p81
      %p83 = scmp.ne.s32.totalorder %s72, %s73
      %p84 = scmp.eq.s32.totalorder %s22, 0
      %p85 = por %p83, %p84
      %p86 = scmp.ne.s32.totalorder %s72, %s73
      %p87 = scmp.eq.s32.totalorder %s23, 1
      %p88 = por %p86, %p87
      %p90 = scmp.ne.s32.totalorder %s73, %s89
      %p91 = scmp.eq.s32.totalorder %s23, 0
      %p92 = por %p90, %p91
      %s93 = ssub.s32 %s24, %s36
      %p94 = scmp.eq.s32.totalorder %s93, 0
      %s96 = sadd.s32 %s95, 1
      %s97 = scalar_select %p94, %s95, %s96
      %p100 = pneg %p94
      %p101 = scmp.eq.s32.totalorder %s17, 1
      %p102 = por %p100, %p101
      %p103 = scmp.ne.s32.totalorder %s95, %s98
      %p104 = scmp.eq.s32.totalorder %s17, 0
      %p105 = por %p103, %p104
      %p106 = scmp.ne.s32.totalorder %s95, %s98
      %p107 = scmp.eq.s32.totalorder %s22, 1
      %p108 = por %p106, %p107
      %p109 = scmp.ne.s32.totalorder %s98, %s99
      %p110 = scmp.eq.s32.totalorder %s22, 0
      %p111 = por %p109, %p110
      %p112 = scmp.ne.s32.totalorder %s98, %s99
      %p113 = scmp.eq.s32.totalorder %s23, 1
      %p114 = por %p112, %p113
      %p116 = scmp.ne.s32.totalorder %s99, %s115
      %p117 = scmp.eq.s32.totalorder %s23, 0
      %p118 = por %p116, %p117
      %p119 = scmp.le.s32.totalorder 1, %s17
      %p120 = scmp.lt.s32.totalorder %s17, 3
      %p121 = pnand %p119, %p120
      %p122 = pneg %p121
      // Predicated region
      $region9: #{tpu_custom_call.1} parent=5 // pred_check
        _
      $region10: #{tpu_custom_call.1} parent=5 // pred_check_branch
        %124 = sbr.rel (%p121) target = $region12
      $region11: #{tpu_custom_call.1} parent=5 // pred_region
        %s125 = ssub.s32 %s17, 1
      $region12: #{tpu_custom_call.1} parent=5 // pred_fallthru
        _
      %p126 = scmp.lt.s32.totalorder %s17, 2
      // Predicated region
      $region13: #{tpu_custom_call.1} parent=5 // pred_check
        %p127 = pneg %p126
      $region14: #{tpu_custom_call.1} parent=5 // pred_check_branch
        %129 = sbr.rel (%p127) target = $region16
      $region15: #{tpu_custom_call.1} parent=5 // pred_region
        // Predicated region
        $region17: #{tpu_custom_call.1} parent=15 // pred_check
          %p130 = pneg %p51
        $region18: #{tpu_custom_call.1} parent=15 // pred_check_branch
          %132 = sbr.rel (%p130) target = $region20
        $region19: #{tpu_custom_call.1} parent=15 // pred_region
          %s133 = sand.u32 %s41, 1
          %s134 = scalar_lea.sflag [#allocation6], %s133
          %s135 = sand.u32 %s41, 1
          %s136 = smul.addr %s135, 8
          %s137 = scalar_lea.vmem [#allocation5], %s136
          %s139 = ssub.s32 128, 128
          %140 = vsyncadd %s134, %s139
          %s141 = sadd.s32 %s25, %s24
          %s142 = smul.addr %s141, 128
          %s143 = scalar_lea.hbm %s0, %s142
          %s145 = sshll.u32 %s137, 4
          %s146 = int_to_ptr.vmem [resolvable:$true] %s145
          %148 = dma.hbm_to_vmem [thread:$0]  %s143, 128, %s146, %s134
        $region20: #{tpu_custom_call.1} parent=15 // pred_fallthru
          _
        // Predicated region
        $region21: #{tpu_custom_call.1} parent=15 // pred_check
          %p149 = pneg %p79
        $region22: #{tpu_custom_call.1} parent=15 // pred_check_branch
          %151 = sbr.rel (%p149) target = $region24
        $region23: #{tpu_custom_call.1} parent=15 // pred_region
          %s152 = sand.u32 %s69, 1
          %s153 = scalar_lea.sflag [#allocation9], %s152
          %s154 = sand.u32 %s69, 1
          %s155 = smul.addr %s154, 8
          %s156 = scalar_lea.vmem [#allocation8], %s155
          %s158 = ssub.s32 128, 128
          %159 = vsyncadd %s153, %s158
          %s160 = sadd.s32 %s25, %s24
          %s161 = smul.addr %s160, 128
          %s162 = scalar_lea.hbm %s1, %s161
          %s164 = sshll.u32 %s156, 4
          %s165 = int_to_ptr.vmem [resolvable:$true] %s164
          %167 = dma.hbm_to_vmem [thread:$0]  %s162, 128, %s165, %s153
        $region24: #{tpu_custom_call.1} parent=15 // pred_fallthru
          _
      $region16: #{tpu_custom_call.1} parent=5 // pred_fallthru
        _
      %p168 = scmp.le.s32.totalorder 1, %s17
      %p169 = scmp.lt.s32.totalorder %s17, 3
      %p170 = pnand %p168, %p169
      %p171 = pneg %p170
      // Predicated region
      $region25: #{tpu_custom_call.1} parent=5 // pred_check
        _
      $region26: #{tpu_custom_call.1} parent=5 // pred_check_branch
        %173 = sbr.rel (%p170) target = $region28
      $region27: #{tpu_custom_call.1} parent=5 // pred_region
        %s174 = ssub.s32 %s17, 1
        %s175 = sand.u32 %s44, 1
        %s176 = scalar_lea.sflag [#allocation6], %s175
        %s177 = sand.u32 %s44, 1
        %s178 = smul.addr %s177, 8
        %s179 = scalar_lea.vmem [#allocation5], %s178
        // Predicated region
        $region29: #{tpu_custom_call.1} parent=27 // pred_check
          %p180 = pneg %p57
        $region30: #{tpu_custom_call.1} parent=27 // pred_check_branch
          %182 = sbr.rel (%p180) target = $region32
        $region31: #{tpu_custom_call.1} parent=27 // pred_region
          %183 = dma.done %s176, 128
        $region32: #{tpu_custom_call.1} parent=27 // pred_fallthru
          _
        %s184 = sand.u32 %s72, 1
        %s185 = scalar_lea.sflag [#allocation9], %s184
        %s186 = sand.u32 %s72, 1
        %s187 = smul.addr %s186, 8
        %s188 = scalar_lea.vmem [#allocation8], %s187
        // Predicated region
        $region33: #{tpu_custom_call.1} parent=27 // pred_check
          %p189 = pneg %p85
        $region34: #{tpu_custom_call.1} parent=27 // pred_check_branch
          %191 = sbr.rel (%p189) target = $region36
        $region35: #{tpu_custom_call.1} parent=27 // pred_region
          %192 = dma.done %s185, 128
        $region36: #{tpu_custom_call.1} parent=27 // pred_fallthru
          _
        %s193 = sand.u32 %s44, 1
        %s194 = scalar_lea.sflag [#allocation6], %s193
        %s195 = sand.u32 %s44, 1
        %s196 = smul.addr %s195, 8
        %s197 = scalar_lea.vmem [#allocation5], %s196
        %p198 = pneg %p57
        %p199 = pneg %p54
        %s200 = sand.u32 %s72, 1
        %s201 = scalar_lea.sflag [#allocation9], %s200
        %s202 = sand.u32 %s72, 1
        %s203 = smul.addr %s202, 8
        %s204 = scalar_lea.vmem [#allocation8], %s203
        %p205 = pneg %p85
        %p206 = pneg %p82
        %p207 = pneg %p111
        %p208 = pneg %p108
        %s209 = sand.u32 %s98, 1
        %s210 = scalar_lea.sflag [#allocation7], %s209
        %s211 = sand.u32 %s98, 1
        %s212 = smul.addr %s211, 8
        %s213 = scalar_lea.vmem [#allocation10], %s212
        %p214 = scmp.eq.s32.totalorder %s27, 0
        // Predicated region
        $region37: #{tpu_custom_call.1} parent=27 // pred_check
          %p215 = pneg %p214
        $region38: #{tpu_custom_call.1} parent=27 // pred_check_branch
          %217 = sbr.rel (%p215) target = $region40
        $region39: #{tpu_custom_call.1} parent=27 // pred_region
          %218 = vst [vmem:[#allocation2] sm:$0xff] 0.0
          %219 = vst [vmem:[#allocation3] sm:$0xff] 0.0
          %220 = vst [vmem:[#allocation4] sm:$0xff] 0.0
        $region40: #{tpu_custom_call.1} parent=27 // pred_fallthru
          _
        %v221 = vld [vmem:[%s179] sm:$0xff]
        %v222 = vld [vmem:[%s188] sm:$0xff]
        %vm223 = vcmp.ge.f32.partialorder %v221, 0.5
        %vm224 = vcmp.eq.f32.partialorder %v222, 1.0
        %vm225 = vcmp.eq.f32.partialorder %v222, 0.0
        %vm226 = vmand %vm223, %vm224
        %v227 = vsel %vm226, 1.0, 0.0
        %vm228 = vmxor %vm223, 1
        %vm229 = vmand %vm228, %vm225
        %v230 = vsel %vm229, 1.0, 0.0
        %v231 = vld [vmem:[#allocation2] sm:$0xff]
        %v232 = vadd.f32 %v227, 0.0
        %v233 = vadd.f32 %v231, %v232
        %234 = vst [vmem:[#allocation2] sm:$0xff] %v233
        %v235 = vld [vmem:[#allocation3] sm:$0xff]
        %v236 = vadd.f32 %v230, 0.0
        %v237 = vadd.f32 %v235, %v236
        %238 = vst [vmem:[#allocation3] sm:$0xff] %v237
        %v239 = vld [vmem:[#allocation4] sm:$0xff]
        %v240 = vadd.f32 %v222, 0.0
        %v241 = vadd.f32 %v239, %v240
        %242 = vst [vmem:[#allocation4] sm:$0xff] %v241
        // Predicated region
        $region41: #{tpu_custom_call.1} parent=27 // pred_check
          %p243 = pneg %p214
        $region42: #{tpu_custom_call.1} parent=27 // pred_check_branch
          %245 = sbr.rel (%p243) target = $region44
        $region43: #{tpu_custom_call.1} parent=27 // pred_region
          %v246 = vld [vmem:[#allocation2] sm:$0xff]
          %247 = vadd.xlane.f32.xlu0 %v246
          %v248 = vpop.xlane.xlu0 %247
          %v249 = vrot.slane %v248, 4
          %v250 = vadd.f32 %v248, %v249
          %v251 = vrot.slane %v250, 2
          %v252 = vadd.f32 %v250, %v251
          %v253 = vrot.slane %v252, 1
          %v254 = vadd.f32 %v252, %v253
          %s255 = vtos %v254
          %v256 = vld [vmem:[#allocation3] sm:$0xff]
          %257 = vadd.xlane.f32.xlu0 %v256
          %v258 = vpop.xlane.xlu0 %257
          %v259 = vrot.slane %v258, 4
          %v260 = vadd.f32 %v258, %v259
          %v261 = vrot.slane %v260, 2
          %v262 = vadd.f32 %v260, %v261
          %v263 = vrot.slane %v262, 1
          %v264 = vadd.f32 %v262, %v263
          %s265 = vtos %v264
          %v266 = vld [vmem:[#allocation4] sm:$0xff]
          %267 = vadd.xlane.f32.xlu0 %v266
          %v268 = vpop.xlane.xlu0 %267
          %v269 = vrot.slane %v268, 4
          %v270 = vadd.f32 %v268, %v269
          %v271 = vrot.slane %v270, 2
          %v272 = vadd.f32 %v270, %v271
          %v273 = vrot.slane %v272, 1
          %v274 = vadd.f32 %v272, %v273
          %s275 = vtos %v274
          %v276 = vlaneseq
          %v277 = vand.u32 %v276, 127
          %vm278 = vcmp.eq.s32.totalorder %v277, 0
          %v279 = vstv %s255
          %v280 = vsel %vm278, %v279, 0.0
          %vm281 = vcmp.eq.s32.totalorder %v277, 1
          %v282 = vstv %s265
          %v283 = vsel %vm281, %v282, 0.0
          %v284 = vadd.f32 %v280, %v283
          %vm285 = vcmp.eq.s32.totalorder %v277, 2
          %v286 = vstv %s275
          %v287 = vsel %vm285, %v286, 0.0
          %v288 = vadd.f32 %v284, %v287
          %289 = vst [vmem:[%s213] sm:$0xff] %v288
        $region44: #{tpu_custom_call.1} parent=27 // pred_fallthru
          _
        %s290 = sand.u32 %s98, 1
        %s291 = scalar_lea.sflag [#allocation7], %s290
        %s292 = sand.u32 %s98, 1
        %s293 = smul.addr %s292, 8
        %s294 = scalar_lea.vmem [#allocation10], %s293
        // Predicated region
        $region45: #{tpu_custom_call.1} parent=27 // pred_check
          %p295 = pneg %p108
        $region46: #{tpu_custom_call.1} parent=27 // pred_check_branch
          %297 = sbr.rel (%p295) target = $region48
        $region47: #{tpu_custom_call.1} parent=27 // pred_region
          %s299 = ssub.s32 128, 128
          %300 = vsyncadd %s291, %s299
          %s301 = smul.addr %s26, 128
          %s302 = scalar_lea.hbm %s2, %s301
          %s304 = sshll.u32 %s294, 4
          %s305 = int_to_ptr.vmem [resolvable:$true] %s304
          %307 = dma.vmem_to_hbm [thread:$0]  %s305, 128, %s302, %s291
        $region48: #{tpu_custom_call.1} parent=27 // pred_fallthru
          _
      $region28: #{tpu_custom_call.1} parent=5 // pred_fallthru
        _
      %p308 = scmp.le.s32.totalorder 2, %s17
      // Predicated region
      $region49: #{tpu_custom_call.1} parent=5 // pred_check
        %p309 = pneg %p308
      $region50: #{tpu_custom_call.1} parent=5 // pred_check_branch
        %311 = sbr.rel (%p309) target = $region52
      $region51: #{tpu_custom_call.1} parent=5 // pred_region
        %s312 = ssub.s32 %s17, 2
        // Predicated region
        $region53: #{tpu_custom_call.1} parent=51 // pred_check
          %p313 = pneg %p114
        $region54: #{tpu_custom_call.1} parent=51 // pred_check_branch
          %315 = sbr.rel (%p313) target = $region56
        $region55: #{tpu_custom_call.1} parent=51 // pred_region
          %s316 = sand.u32 %s99, 1
          %s317 = scalar_lea.sflag [#allocation7], %s316
          %s318 = sand.u32 %s99, 1
          %s319 = smul.addr %s318, 8
          %s320 = scalar_lea.vmem [#allocation10], %s319
          %321 = dma.done %s317, 128
        $region56: #{tpu_custom_call.1} parent=51 // pred_fallthru
          _
      $region52: #{tpu_custom_call.1} parent=5 // pred_fallthru
        _
    $region6: #{tpu_custom_call.1} parent=1 // loop_footer
      %s21 = sadd.s32 1, %s17
    $region7: #{tpu_custom_call.1} parent=1 // loop_footer_branch
      %16 = sbr.rel target = $region3
    $region8: #{tpu_custom_call.1} parent=1 // loop_exit
      _
    %322 = vsyncpa [#allocation6], 1
    %s323 = scalar_lea.sflag [#allocation6], 1
    %324 = vsyncpa %s323, 1
    %325 = vsyncpa [#allocation9], 1
    %s326 = scalar_lea.sflag [#allocation9], 1
    %327 = vsyncpa %s326, 1
    %328 = vsyncpa [#allocation7], 1
    %s329 = scalar_lea.sflag [#allocation7], 1
    %330 = vsyncpa %s329, 1

</llo_original>
